<compile_context>
chip_gen: v6e
topology: v6e:2x2x1
jax: 0.10.0
libtpu: 0.0.40
codegen_flags: <defaults>
</compile_context>

<pallas_src>
import jax
import jax.numpy as jnp
from jax import lax
from jax.experimental import pallas as pl
from jax.experimental.pallas import tpu as pltpu

M1 = 1.0
M2 = 0.5
NUM_FACTORS = 64
_PAD = 2 * NUM_FACTORS  # 128 lanes: [X(64) | y(1) | ones(1) | zero-pad(62)]


def _make_kernel(F, B_total, tile_b, need_mask):
    y_col = F          # lane index of the y column in Z
    one_col = F + 1    # lane index of the all-ones column in Z

    def kernel(yp_ref, yt_ref, loss_ref, s_acc):
        i = pl.program_id(0)

        @pl.when(i == 0)
        def _init():
            s_acc[...] = jnp.zeros_like(s_acc)

        X = yp_ref[...]                      # [T, F]  native dtype
        t = yt_ref[...].astype(X.dtype)      # [T, 1]
        T = X.shape[0]

        # Second 64-lane half of Z: lane 0 -> y, lane 1 -> 1, rest 0.
        colid = lax.broadcasted_iota(jnp.int32, (T, F), 1)
        tail = jnp.where(colid == 0, t, (colid == 1).astype(X.dtype))

        if need_mask:
            # Zero rows past the true batch size (remainder tile).
            row = i * tile_b + lax.broadcasted_iota(jnp.int32, (T, 1), 0)
            valid = row < B_total
            X = jnp.where(valid, X, jnp.zeros_like(X))
            tail = jnp.where(valid, tail, jnp.zeros_like(tail))

        # Lane-dense staging block (two aligned 64-lane halves -> 128 lanes).
        Z = jnp.concatenate([X, tail], axis=1)           # [T, 128]

        # One MXU Gram pass per tile: S += Z^T Z (f32 accumulation).
        s_acc[...] += lax.dot_general(
            Z, Z, (((0,), (0,)), ((), ())),
            preferred_element_type=jnp.float32)

        @pl.when(i == pl.num_programs(0) - 1)
        def _epilogue():
            S = s_acc[...]                                   # [128, 128] f32
            Sxx   = S[:F, :F]                                # X^T X       [F,F]
            c_raw = S[:F, y_col:y_col + 1]                   # X^T y       [F,1]
            sx_c  = S[:F, one_col:one_col + 1]               # col sums X  [F,1]
            sx_r  = S[one_col:one_col + 1, :F]               # col sums X  [1,F]
            syy   = S[y_col:y_col + 1, y_col:y_col + 1]      # y^T y       [1,1]
            sy    = S[y_col:y_col + 1, one_col:one_col + 1]  # sum y       [1,1]

            inv_n = jnp.float32(1.0 / B_total)

            # Centered second moments.
            G  = Sxx - (sx_c * inv_n) * sx_r                 # [F,F]
            c  = c_raw - sx_c * (sy * inv_n)                 # [F,1]
            yy = syy - sy * sy * inv_n                       # [1,1]

            # diag(G) without a gather: iota mask (runs once per call).
            rid = lax.broadcasted_iota(jnp.int32, (F, F), 0)
            cid = lax.broadcasted_iota(jnp.int32, (F, F), 1)
            Gd = jnp.where(rid == cid, G, 0.0)
            diag_row = jnp.sum(Gd, axis=0, keepdims=True)    # [1,F]
            diag_col = jnp.sum(Gd, axis=1, keepdims=True)    # [F,1]

            # Factor-factor correlation matrix; sum of squares (incl. diagonal),
            # exactly like torch.sum(corrcoef(y_pred.T) ** 2).
            corr = G * lax.rsqrt(diag_row) * lax.rsqrt(diag_col)
            avr_corr = jnp.sum(corr * corr, keepdims=True)   # [1,1]

            # Per-factor IC: corr(y, X[:, j]) = c_j / sqrt(G_jj * yy); summed.
            ic_sum = jnp.sum(c * lax.rsqrt(diag_col * yy), keepdims=True)

            # Composite-factor IC: (1^T c) / sqrt(1^T G 1 * yy).
            sum_c = jnp.sum(c, keepdims=True)
            sum_G = jnp.sum(G, keepdims=True)
            corr_sum = sum_c * lax.rsqrt(sum_G * yy)

            loss = (M1 * (avr_corr * jnp.float32(1.0 / 4096.0))
                    - ic_sum * jnp.float32(1.0 / 64.0)
                    - M2 * corr_sum)
            loss_ref[...] = loss.astype(loss_ref.dtype)

    return kernel


def corr_loss(y_pred, y_true):
    """y_pred: [B, 1, 64], y_true: [B, 1, 1]  ->  scalar loss (training mode)."""
    B = y_pred.shape[0]
    F = y_pred.shape[-1]
    assert F == NUM_FACTORS, "module hardcodes 64 factors (constants 64 / 4096)"
    # squeeze_(1); keep native dtype (no wrapper f32 cast -> fewer HBM bytes).
    yp = y_pred.reshape(B, F)
    yt = y_true.reshape(B, 1)

    # Batch tile: sublane-aligned, large enough to amortize per-step overhead,
    # bounded so buffers fit comfortably in scoped VMEM on all chips.
    itemsize = jnp.dtype(yp.dtype).itemsize
    tile_b_max = 8192 if itemsize <= 2 else 4096
    if B <= tile_b_max:
        tile_b = max(8, ((B + 7) // 8) * 8)
    else:
        tile_b = tile_b_max
    num_tiles = pl.cdiv(B, tile_b)
    need_mask = (num_tiles * tile_b != B)

    kernel = _make_kernel(F, B, tile_b, need_mask)

    out = pl.pallas_call(
        kernel,
        out_shape=jax.ShapeDtypeStruct((1, 1), jnp.float32),
        grid=(num_tiles,),
        in_specs=[
            pl.BlockSpec((tile_b, F), lambda i: (i, 0)),
            pl.BlockSpec((tile_b, 1), lambda i: (i, 0)),
        ],
        out_specs=pl.BlockSpec((1, 1), lambda i: (0, 0)),
        scratch_shapes=[
            pltpu.VMEM((_PAD, _PAD), jnp.float32),    # moment accumulator S
        ],
        compiler_params=pltpu.CompilerParams(
            dimension_semantics=("arbitrary",),
            vmem_limit_bytes=32 * 1024 * 1024,
        ),
    )(yp, yt)
    return out[0, 0]


def corr_loss_ref(y_pred, y_true, m1=M1, m2=M2):
    """Pure-JAX reference mirroring the PyTorch code path (for validation)."""
    hp = lax.Precision.HIGHEST
    X = y_pred.reshape(y_pred.shape[0], -1).astype(jnp.float32)
    y = y_true.reshape(y_true.shape[0]).astype(jnp.float32)
    Xc = X - X.mean(axis=0, keepdims=True)
    yc = y - y.mean()
    G = jnp.dot(Xc.T, Xc, precision=hp)
    d = jnp.diag(G)
    corr = G / jnp.sqrt(d[None, :] * d[:, None])
    avr = jnp.sum(corr ** 2)
    c = jnp.dot(Xc.T, yc, precision=hp)
    yy = jnp.dot(yc, yc, precision=hp)
    ic_sum = jnp.sum(c / jnp.sqrt(d * yy))
    s = X.sum(axis=1)
    sc = s - s.mean()
    csum = jnp.dot(sc, yc, precision=hp) / jnp.sqrt(
        jnp.dot(sc, sc, precision=hp) * yy)
    return m1 * (avr / 4096.0) - ic_sum / 64.0 - m2 * csum


if __name__ == "__main__":
    key = jax.random.PRNGKey(0)
    k1, k2 = jax.random.split(key)
    B = 16
    y_pred = jax.random.normal(k1, (B, 1, NUM_FACTORS), dtype=jnp.float32)
    y_true = jax.random.normal(k2, (B, 1, 1), dtype=jnp.float32)

    loss = corr_loss(y_pred, y_true)
    jax.block_until_ready(loss)

    ref = corr_loss_ref(y_pred, y_true)
    assert jnp.allclose(loss, ref, rtol=2e-3, atol=2e-3), (float(loss), float(ref))

    print("KERNEL_OK")
</pallas_src>

<mosaic_0001>
module attributes {stable_mosaic.version = 11 : i64} {
  func.func @kernel(%arg0: i32, %arg1: memref<16x64xf32, #tpu.memory_space<vmem>>, %arg2: memref<16x1xf32, #tpu.memory_space<vmem>>, %arg3: memref<1x1xf32, #tpu.memory_space<vmem>>, %arg4: memref<128x128xf32, #tpu.memory_space<vmem>>) attributes {dimension_semantics = [#tpu.dimension_semantics<arbitrary>], iteration_bounds = array<i64: 1>, scalar_prefetch = 0 : i64, scratch_operands = 1 : i64, tpu.core_type = #tpu.core_type<tc>, window_params = [{transform_indices = @transform_0, window_bounds = array<i64: 16, 64>}, {transform_indices = @transform_1, window_bounds = array<i64: 16, 1>}, {pipeline_mode = #tpu.pipeline_mode<synchronous>, transform_indices = @transform_2, window_bounds = array<i64: 1, 1>}]} {
    %c0_i32 = arith.constant 0 : i32
    %0 = arith.cmpi eq, %arg0, %c0_i32 : i32
    %1 = arith.extui %0 : i1 to i32
    %c0_i32_0 = arith.constant 0 : i32
    %2 = arith.cmpi ne, %1, %c0_i32_0 : i32
    scf.if %2 {
      %cst_11 = arith.constant 0.000000e+00 : f32
      %23 = vector.broadcast %cst_11 : f32 to vector<128x128xf32>
      %c0_12 = arith.constant 0 : index
      %c0_13 = arith.constant 0 : index
      %24 = vector.load %arg4[%c0_12, %c0_13] : memref<128x128xf32, #tpu.memory_space<vmem>>, vector<128x128xf32>
      tpu.vector_store %arg4[%c0_12, %c0_13], %23 {strides = array<i32>} : memref<128x128xf32, #tpu.memory_space<vmem>>, vector<128x128xf32>,
    } else {
    }
    %c0 = arith.constant 0 : index
    %c0_1 = arith.constant 0 : index
    %3 = vector.load %arg1[%c0, %c0_1] : memref<16x64xf32, #tpu.memory_space<vmem>>, vector<16x64xf32>
    %c0_2 = arith.constant 0 : index
    %c0_3 = arith.constant 0 : index
    %4 = vector.load %arg2[%c0_2, %c0_3] : memref<16x1xf32, #tpu.memory_space<vmem>>, vector<16x1xf32>
    %5 = tpu.iota {dimensions = array<i32: 1>} : vector<16x64xi32>
    %c0_i32_4 = arith.constant 0 : i32
    %6 = vector.broadcast %c0_i32_4 : i32 to vector<16x64xi32>
    %7 = arith.cmpi eq, %5, %6 : vector<16x64xi32>
    %c1_i32 = arith.constant 1 : i32
    %8 = vector.broadcast %c1_i32 : i32 to vector<16x64xi32>
    %9 = arith.cmpi eq, %5, %8 : vector<16x64xi32>
    %10 = arith.extui %9 : vector<16x64xi1> to vector<16x64xi32>
    %11 = arith.sitofp %10 : vector<16x64xi32> to vector<16x64xf32>
    %12 = vector.shape_cast %4 : vector<16x1xf32> to vector<16x1xf32>
    %13 = vector.broadcast %12 : vector<16x1xf32> to vector<16x64xf32>
    %14 = arith.select %7, %13, %11 : vector<16x64xi1>, vector<16x64xf32>
    %15 = tpu.concatenate %3, %14 in 1 : vector<16x64xf32>, vector<16x64xf32> -> vector<16x128xf32>
    %c0_5 = arith.constant 0 : index
    %c0_6 = arith.constant 0 : index
    %16 = vector.load %arg4[%c0_5, %c0_6] : memref<128x128xf32, #tpu.memory_space<vmem>>, vector<128x128xf32>
    %cst = arith.constant dense<0.000000e+00> : vector<128x128xf32>
    %17 = tpu.matmul %15, %15, %cst {dimension_numbers = #tpu.dot_dimension_numbers<[0], [0], [1], [1], [0, 1, 1, 1], [], []>} : vector<16x128xf32>, vector<16x128xf32>, vector<128x128xf32> -> vector<128x128xf32>
    %18 = arith.addf %16, %17 : vector<128x128xf32>
    %c0_7 = arith.constant 0 : index
    %c0_8 = arith.constant 0 : index
    %19 = vector.load %arg4[%c0_7, %c0_8] : memref<128x128xf32, #tpu.memory_space<vmem>>, vector<128x128xf32>
    tpu.vector_store %arg4[%c0_7, %c0_8], %18 {strides = array<i32>} : memref<128x128xf32, #tpu.memory_space<vmem>>, vector<128x128xf32>,
    %c0_i32_9 = arith.constant 0 : i32
    %20 = arith.cmpi eq, %arg0, %c0_i32_9 : i32
    %21 = arith.extui %20 : i1 to i32
    %c0_i32_10 = arith.constant 0 : i32
    %22 = arith.cmpi ne, %21, %c0_i32_10 : i32
    scf.if %22 {
      %c0_11 = arith.constant 0 : index
      %c0_12 = arith.constant 0 : index
      %23 = vector.load %arg4[%c0_11, %c0_12] : memref<128x128xf32, #tpu.memory_space<vmem>>, vector<128x128xf32>
      %24 = vector.extract_strided_slice %23 {offsets = [0, 0], sizes = [64, 64], strides = [1, 1]} : vector<128x128xf32> to vector<64x64xf32>
      %25 = vector.extract_strided_slice %23 {offsets = [0, 64], sizes = [64, 1], strides = [1, 1]} : vector<128x128xf32> to vector<64x1xf32>
      %26 = vector.extract_strided_slice %23 {offsets = [0, 65], sizes = [64, 1], strides = [1, 1]} : vector<128x128xf32> to vector<64x1xf32>
      %27 = vector.extract_strided_slice %23 {offsets = [65, 0], sizes = [1, 64], strides = [1, 1]} : vector<128x128xf32> to vector<1x64xf32>
      %28 = vector.extract_strided_slice %23 {offsets = [64, 64], sizes = [1, 1], strides = [1, 1]} : vector<128x128xf32> to vector<1x1xf32>
      %29 = vector.extract_strided_slice %23 {offsets = [64, 65], sizes = [1, 1], strides = [1, 1]} : vector<128x128xf32> to vector<1x1xf32>
      %cst_13 = arith.constant 6.250000e-02 : f32
      %30 = vector.broadcast %cst_13 : f32 to vector<64x1xf32>
      %31 = arith.mulf %26, %30 : vector<64x1xf32>
      %32 = vector.broadcast %31 : vector<64x1xf32> to vector<64x64xf32>
      %33 = vector.broadcast %27 : vector<1x64xf32> to vector<64x64xf32>
      %34 = arith.mulf %32, %33 : vector<64x64xf32>
      %35 = arith.subf %24, %34 : vector<64x64xf32>
      %cst_14 = arith.constant 6.250000e-02 : f32
      %36 = vector.broadcast %cst_14 : f32 to vector<1x1xf32>
      %37 = arith.mulf %29, %36 : vector<1x1xf32>
      %38 = vector.broadcast %37 : vector<1x1xf32> to vector<64x1xf32>
      %39 = arith.mulf %26, %38 : vector<64x1xf32>
      %40 = arith.subf %25, %39 : vector<64x1xf32>
      %41 = arith.mulf %29, %29 : vector<1x1xf32>
      %cst_15 = arith.constant 6.250000e-02 : f32
      %42 = vector.broadcast %cst_15 : f32 to vector<1x1xf32>
      %43 = arith.mulf %41, %42 : vector<1x1xf32>
      %44 = arith.subf %28, %43 : vector<1x1xf32>
      %45 = tpu.iota {dimensions = array<i32: 0>} : vector<64x64xi32>
      %46 = tpu.iota {dimensions = array<i32: 1>} : vector<64x64xi32>
      %47 = arith.cmpi eq, %45, %46 : vector<64x64xi32>
      %cst_16 = arith.constant 0.000000e+00 : f32
      %48 = vector.broadcast %cst_16 : f32 to vector<64x64xf32>
      %49 = arith.select %47, %35, %48 : vector<64x64xi1>, vector<64x64xf32>
      %cst_17 = arith.constant dense<0.000000e+00> : vector<64xf32>
      %50 = vector.multi_reduction <add>, %49, %cst_17 [0] : vector<64x64xf32> to vector<64xf32>
      %51 = vector.shape_cast %50 : vector<64xf32> to vector<1x64xf32>
      %cst_18 = arith.constant dense<0.000000e+00> : vector<64xf32>
      %52 = vector.multi_reduction <add>, %49, %cst_18 [1] : vector<64x64xf32> to vector<64xf32>
      %53 = vector.shape_cast %52 : vector<64xf32> to vector<64x1xf32>
      %54 = math.rsqrt %51 : vector<1x64xf32>
      %55 = vector.broadcast %54 : vector<1x64xf32> to vector<64x64xf32>
      %56 = arith.mulf %35, %55 : vector<64x64xf32>
      %57 = math.rsqrt %53 : vector<64x1xf32>
      %58 = vector.broadcast %57 : vector<64x1xf32> to vector<64x64xf32>
      %59 = arith.mulf %56, %58 : vector<64x64xf32>
      %60 = arith.mulf %59, %59 : vector<64x64xf32>
      %61 = vector.shape_cast %60 : vector<64x64xf32> to vector<1x64x64xf32>
      %cst_19 = arith.constant dense<0.000000e+00> : vector<1xf32>
      %62 = vector.multi_reduction <add>, %61, %cst_19 [1, 2] : vector<1x64x64xf32> to vector<1xf32>
      %63 = vector.shape_cast %62 : vector<1xf32> to vector<1x1x1xf32>
      %64 = vector.extract %63[0, 0, 0] : f32 from vector<1x1x1xf32>
      %65 = vector.broadcast %64 : f32 to vector<1x1xf32>
      %66 = vector.broadcast %44 : vector<1x1xf32> to vector<64x1xf32>
      %67 = arith.mulf %53, %66 : vector<64x1xf32>
      %68 = math.rsqrt %67 : vector<64x1xf32>
      %69 = arith.mulf %40, %68 : vector<64x1xf32>
      %70 = vector.shape_cast %69 : vector<64x1xf32> to vector<1x64x1xf32>
      %cst_20 = arith.constant dense<0.000000e+00> : vector<1xf32>
      %71 = vector.multi_reduction <add>, %70, %cst_20 [1, 2] : vector<1x64x1xf32> to vector<1xf32>
      %72 = vector.shape_cast %71 : vector<1xf32> to vector<1x1x1xf32>
      %73 = vector.extract %72[0, 0, 0] : f32 from vector<1x1x1xf32>
      %74 = vector.broadcast %73 : f32 to vector<1x1xf32>
      %75 = vector.shape_cast %40 : vector<64x1xf32> to vector<1x64x1xf32>
      %cst_21 = arith.constant dense<0.000000e+00> : vector<1xf32>
      %76 = vector.multi_reduction <add>, %75, %cst_21 [1, 2] : vector<1x64x1xf32> to vector<1xf32>
      %77 = vector.shape_cast %76 : vector<1xf32> to vector<1x1x1xf32>
      %78 = vector.extract %77[0, 0, 0] : f32 from vector<1x1x1xf32>
      %79 = vector.broadcast %78 : f32 to vector<1x1xf32>
      %80 = vector.shape_cast %35 : vector<64x64xf32> to vector<1x64x64xf32>
      %cst_22 = arith.constant dense<0.000000e+00> : vector<1xf32>
      %81 = vector.multi_reduction <add>, %80, %cst_22 [1, 2] : vector<1x64x64xf32> to vector<1xf32>
      %82 = vector.shape_cast %81 : vector<1xf32> to vector<1x1x1xf32>
      %83 = vector.extract %82[0, 0, 0] : f32 from vector<1x1x1xf32>
      %84 = vector.broadcast %83 : f32 to vector<1x1xf32>
      %85 = arith.mulf %84, %44 : vector<1x1xf32>
      %86 = math.rsqrt %85 : vector<1x1xf32>
      %87 = arith.mulf %79, %86 : vector<1x1xf32>
      %cst_23 = arith.constant 2.44140625E-4 : f32
      %88 = vector.broadcast %cst_23 : f32 to vector<1x1xf32>
      %89 = arith.mulf %65, %88 : vector<1x1xf32>
      %cst_24 = arith.constant 1.000000e+00 : f32
      %90 = vector.broadcast %cst_24 : f32 to vector<1x1xf32>
      %91 = arith.mulf %90, %89 : vector<1x1xf32>
      %cst_25 = arith.constant 1.562500e-02 : f32
      %92 = vector.broadcast %cst_25 : f32 to vector<1x1xf32>
      %93 = arith.mulf %74, %92 : vector<1x1xf32>
      %94 = arith.subf %91, %93 : vector<1x1xf32>
      %cst_26 = arith.constant 5.000000e-01 : f32
      %95 = vector.broadcast %cst_26 : f32 to vector<1x1xf32>
      %96 = arith.mulf %95, %87 : vector<1x1xf32>
      %97 = arith.subf %94, %96 : vector<1x1xf32>
      %c0_27 = arith.constant 0 : index
      %c0_28 = arith.constant 0 : index
      %98 = vector.load %arg3[%c0_27, %c0_28] : memref<1x1xf32, #tpu.memory_space<vmem>>, vector<1x1xf32>
      tpu.vector_store %arg3[%c0_27, %c0_28], %97 {strides = array<i32>} : memref<1x1xf32, #tpu.memory_space<vmem>>, vector<1x1xf32>,
    } else {
    }
    return
  }
  func.func @transform_0(%arg0: i32) -> (i32, i32) {
    %c0_i32 = arith.constant 0 : i32
    %c0_i32_0 = arith.constant 0 : i32
    return %arg0, %c0_i32 : i32, i32
  }
  func.func @transform_1(%arg0: i32) -> (i32, i32) {
    %c0_i32 = arith.constant 0 : i32
    %c0_i32_0 = arith.constant 0 : i32
    return %arg0, %c0_i32 : i32, i32
  }
  func.func @transform_2(%arg0: i32) -> (i32, i32) {
    %c0_i32 = arith.constant 0 : i32
    %c0_i32_0 = arith.constant 0 : i32
    %c0_i32_1 = arith.constant 0 : i32
    return %c0_i32, %c0_i32_0 : i32, i32
  }
}

</mosaic_0001>

<llo_original>
// kernel: tpu_custom_call.1
$region0: #{tpu_custom_call.1}
  #allocation0 [shape = 'u32[]', space=smem, size = 0x4, offset = 0x4, fixed_abs, tag = 'smem constant byte address 0x4 - core index']
  #allocation1 [shape = 'u32[144,128]{1,0:T(1,128)}', space=vmem, size = 0x12000, scoped, tag = 'internal scratch']
  #allocation2 [shape = 'f32[128,128]{1,0:T(8,128)}', space=vmem, size = 0x10000, scoped, tag = 'scratch operand']
  %s0 = inlined_call_operand.vmem [shape: f32[16,64], index: 0, kind: input, shape index: {}]
  %s1 = inlined_call_operand.vmem [shape: f32[16,1], index: 1, kind: input, shape index: {}]
  %s2 = inlined_call_operand.hbm [shape: f32[1,1], index: 2, kind: output, shape index: {}]
  %s3 = sld [smem:[#allocation0]]
  $region26: #{tpu_custom_call.1} parent=0
    _
  %s5 = ssub.s32 1, %s3
  %s6 = scalar_select 0, %s5, %s3
  $region1: #{tpu_custom_call.1} parent=0
    #allocation3 [shape = 'u8[512]{0}', space=vmem, size = 0x400, scoped, tag = 'output window, operand 0, single buffered']
    #allocation4 [shape = 's32[1]{0}', space=sflag, size = 0x4, scoped, tag = 'scoped memory for tpu_custom_call.1']
    %7 = vsyncpa [#allocation4], 0
    // Predicated region
    $region2: #{tpu_custom_call.1} parent=1 // pred_check
      _
    $region3: #{tpu_custom_call.1} parent=1 // pred_check_branch
      %9 = sbr.rel (0) target = $region5
    $region4: #{tpu_custom_call.1} parent=1 // pred_region
      _
    $region5: #{tpu_custom_call.1} parent=1 // pred_fallthru
      _
    // Predicated region
    $region6: #{tpu_custom_call.1} parent=1 // pred_check
      _
    $region7: #{tpu_custom_call.1} parent=1 // pred_check_branch
      %11 = sbr.rel (0) target = $region9
    $region8: #{tpu_custom_call.1} parent=1 // pred_region
      _
    $region9: #{tpu_custom_call.1} parent=1 // pred_fallthru
      _
    %p12 = scmp.eq.s32.totalorder 0, 0
    // Predicated region
    $region10: #{tpu_custom_call.1} parent=1 // pred_check
      %p13 = pneg %p12
    $region11: #{tpu_custom_call.1} parent=1 // pred_check_branch
      %15 = sbr.rel (%p13) target = $region13
    $region12: #{tpu_custom_call.1} parent=1 // pred_region
      %16 = vst [vmem:[#allocation2] sm:$0xff] 0.0
      %17 = vst [vmem:[#allocation2 + $0x8] sm:$0xff] 0.0
      %18 = vst [vmem:[#allocation2 + $0x10] sm:$0xff] 0.0
      %19 = vst [vmem:[#allocation2 + $0x18] sm:$0xff] 0.0
      %20 = vst [vmem:[#allocation2 + $0x20] sm:$0xff] 0.0
      %21 = vst [vmem:[#allocation2 + $0x28] sm:$0xff] 0.0
      %22 = vst [vmem:[#allocation2 + $0x30] sm:$0xff] 0.0
      %23 = vst [vmem:[#allocation2 + $0x38] sm:$0xff] 0.0
      %24 = vst [vmem:[#allocation2 + $0x40] sm:$0xff] 0.0
      %25 = vst [vmem:[#allocation2 + $0x48] sm:$0xff] 0.0
      %26 = vst [vmem:[#allocation2 + $0x50] sm:$0xff] 0.0
      %27 = vst [vmem:[#allocation2 + $0x58] sm:$0xff] 0.0
      %28 = vst [vmem:[#allocation2 + $0x60] sm:$0xff] 0.0
      %29 = vst [vmem:[#allocation2 + $0x68] sm:$0xff] 0.0
      %30 = vst [vmem:[#allocation2 + $0x70] sm:$0xff] 0.0
      %31 = vst [vmem:[#allocation2 + $0x78] sm:$0xff] 0.0
    $region13: #{tpu_custom_call.1} parent=1 // pred_fallthru
      _
    %v32 = vld [vmem:[%s0] sm:$0xff]
    %v33 = vld [vmem:[%s0 + $0x8] sm:$0xff]
    %v34 = vld [vmem:[%s1] sm:$0xff]
    %v35 = vld [vmem:[%s1 + $0x8] sm:$0xff]
    %v36 = vlaneseq
    %v37 = vand.u32 %v36, 127
    %vm38 = vcmp.eq.s32.totalorder %v37, 0
    %vm39 = vcmp.eq.s32.totalorder %v37, 1
    %v40 = vsel %vm39, 1, 0
    %v41 = vcvt.s32.f32 %v40
    %43 = vset.pattern.permute.xlu0 0
    %44 = vperm.xlu0 %43, %v34
    %v45 = vpop.permute.xlu0 %44
    %48 = vset.pattern.permute.xlu0 0
    %49 = vperm.xlu0 %48, %v35
    %v50 = vpop.permute.xlu0 %49
    %v52 = vsel %vm38, %v45, %v41
    %v53 = vsel %vm38, %v50, %v41
    %56 = vrot.lane.b32.xlu0 %v52, 64
    %v57 = vpop.permute.xlu0 %56
    %58 = vrot.lane.b32.xlu0 %v53, 64
    %v59 = vpop.permute.xlu0 %58
    %vm62 = vcmask 523264
    %v63 = vsel %vm62, %v32, %v57
    %v64 = vsel %vm62, %v33, %v59
    %v65 = vld [vmem:[#allocation2] sm:$0xff]
    %v66 = vld [vmem:[#allocation2 + $0x8] sm:$0xff]
    %v67 = vld [vmem:[#allocation2 + $0x10] sm:$0xff]
    %v68 = vld [vmem:[#allocation2 + $0x18] sm:$0xff]
    %v69 = vld [vmem:[#allocation2 + $0x20] sm:$0xff]
    %v70 = vld [vmem:[#allocation2 + $0x28] sm:$0xff]
    %v71 = vld [vmem:[#allocation2 + $0x30] sm:$0xff]
    %v72 = vld [vmem:[#allocation2 + $0x38] sm:$0xff]
    %v73 = vld [vmem:[#allocation2 + $0x40] sm:$0xff]
    %v74 = vld [vmem:[#allocation2 + $0x48] sm:$0xff]
    %v75 = vld [vmem:[#allocation2 + $0x50] sm:$0xff]
    %v76 = vld [vmem:[#allocation2 + $0x58] sm:$0xff]
    %v77 = vld [vmem:[#allocation2 + $0x60] sm:$0xff]
    %v78 = vld [vmem:[#allocation2 + $0x68] sm:$0xff]
    %v79 = vld [vmem:[#allocation2 + $0x70] sm:$0xff]
    %v80 = vld [vmem:[#allocation2 + $0x78] sm:$0xff]
    %81 = vxpose.xlu0.b32.start [1/16] %v63, 128
    %82 = vxpose.xlu0.b32.cont [2/16] %v64, 128
    %83 = vxpose.xlu0.b32.cont [3/16] 0.0, 128
    %84 = vxpose.xlu0.b32.cont [4/16] 0.0, 128
    %85 = vxpose.xlu0.b32.cont [5/16] 0.0, 128
    %86 = vxpose.xlu0.b32.cont [6/16] 0.0, 128
    %87 = vxpose.xlu0.b32.cont [7/16] 0.0, 128
    %88 = vxpose.xlu0.b32.cont [8/16] 0.0, 128
    %89 = vxpose.xlu0.b32.cont [9/16] 0.0, 128
    %90 = vxpose.xlu0.b32.cont [10/16] 0.0, 128
    %91 = vxpose.xlu0.b32.cont [11/16] 0.0, 128
    %92 = vxpose.xlu0.b32.cont [12/16] 0.0, 128
    %93 = vxpose.xlu0.b32.cont [13/16] 0.0, 128
    %94 = vxpose.xlu0.b32.cont [14/16] 0.0, 128
    %95 = vxpose.xlu0.b32.cont [15/16] 0.0, 128
    %96 = vxpose.xlu0.b32.end [16/16] 0.0, 128
    %v97 = vpop.trf.xlu0
    %v98 = vpop.trf.xlu0
    %v99 = vpop.trf.xlu0
    %v100 = vpop.trf.xlu0
    %v101 = vpop.trf.xlu0
    %v102 = vpop.trf.xlu0
    %v103 = vpop.trf.xlu0
    %v104 = vpop.trf.xlu0
    %v105 = vpop.trf.xlu0
    %v106 = vpop.trf.xlu0
    %v107 = vpop.trf.xlu0
    %v108 = vpop.trf.xlu0
    %v109 = vpop.trf.xlu0
    %v110 = vpop.trf.xlu0
    %v111 = vpop.trf.xlu0
    %v112 = vpop.trf.xlu0
    %vm113 = vcmask 130048
    %v115 = vsel %vm113, %v97, 0
    %v118 = vsel %vm113, %v98, 0
    %v121 = vsel %vm113, %v99, 0
    %v124 = vsel %vm113, %v100, 0
    %v127 = vsel %vm113, %v101, 0
    %v130 = vsel %vm113, %v102, 0
    %v133 = vsel %vm113, %v103, 0
    %v136 = vsel %vm113, %v104, 0
    %v139 = vsel %vm113, %v105, 0
    %v142 = vsel %vm113, %v106, 0
    %v145 = vsel %vm113, %v107, 0
    %v148 = vsel %vm113, %v108, 0
    %v151 = vsel %vm113, %v109, 0
    %v154 = vsel %vm113, %v110, 0
    %v157 = vsel %vm113, %v111, 0
    %v160 = vsel %vm113, %v112, 0
    %162 = vmatprep.subr.mxu0 0.0
    %163 = vmatpush1.msra.mxu0 0.0
    %164 = vmatprep.subr.mxu0 0.0
    %165 = vmatpush1.msra.mxu0 0.0
    %166 = vmatprep.subr.mxu0 0.0
    %167 = vmatpush1.msra.mxu0 0.0
    %168 = vmatprep.subr.mxu0 0.0
    %169 = vmatpush1.msra.mxu0 0.0
    %170 = vmatprep.subr.mxu0 0.0
    %171 = vmatpush1.msra.mxu0 0.0
    %172 = vmatprep.subr.mxu0 0.0
    %173 = vmatpush1.msra.mxu0 0.0
    %174 = vmatprep.subr.mxu0 0.0
    %175 = vmatpush1.msra.mxu0 0.0
    %176 = vmatprep.subr.mxu0 0.0
    %177 = vmatpush1.msra.mxu0 0.0
    %178 = vmatprep.subr.mxu0 0.0
    %179 = vmatpush1.msra.mxu0 0.0
    %180 = vmatprep.subr.mxu0 0.0
    %181 = vmatpush1.msra.mxu0 0.0
    %182 = vmatprep.subr.mxu0 0.0
    %183 = vmatpush1.msra.mxu0 0.0
    %184 = vmatprep.subr.mxu0 0.0
    %185 = vmatpush1.msra.mxu0 0.0
    %186 = vmatprep.subr.mxu0 0.0
    %187 = vmatpush1.msra.mxu0 0.0
    %188 = vmatprep.subr.mxu0 0.0
    %189 = vmatpush1.msra.mxu0 0.0
    %190 = vmatprep.subr.mxu0 0.0
    %191 = vmatpush1.msra.mxu0 %v64
    %192 = vmatprep.subr.mxu0 0.0
    %193 = vmatpush1.msra.mxu0 %v63
    %194 = vmatprep.subr.mxu0 0.0
    %195 = vmatpush2.msra.mxu0 0.0
    %196 = vmatprep.subr.mxu0 0.0
    %197 = vmatpush2.msra.mxu0 0.0
    %198 = vmatprep.subr.mxu0 0.0
    %199 = vmatpush2.msra.mxu0 0.0
    %200 = vmatprep.subr.mxu0 0.0
    %201 = vmatpush2.msra.mxu0 0.0
    %202 = vmatprep.subr.mxu0 0.0
    %203 = vmatpush2.msra.mxu0 0.0
    %204 = vmatprep.subr.mxu0 0.0
    %205 = vmatpush2.msra.mxu0 0.0
    %206 = vmatprep.subr.mxu0 0.0
    %207 = vmatpush2.msra.mxu0 0.0
    %208 = vmatprep.subr.mxu0 0.0
    %209 = vmatpush2.msra.mxu0 0.0
    %210 = vmatprep.subr.mxu0 0.0
    %211 = vmatpush2.msra.mxu0 0.0
    %212 = vmatprep.subr.mxu0 0.0
    %213 = vmatpush2.msra.mxu0 0.0
    %214 = vmatprep.subr.mxu0 0.0
    %215 = vmatpush2.msra.mxu0 0.0
    %216 = vmatprep.subr.mxu0 0.0
    %217 = vmatpush2.msra.mxu0 0.0
    %218 = vmatprep.subr.mxu0 0.0
    %219 = vmatpush2.msra.mxu0 0.0
    %220 = vmatprep.subr.mxu0 0.0
    %221 = vmatpush2.msra.mxu0 0.0
    %222 = vmatprep.subr.mxu0 0.0
    %223 = vmatpush2.msra.mxu0 0.0
    %224 = vmatprep.subr.mxu0 0.0
    %225 = vmatpush2.msra.mxu0 0.0
    %226 = vmatprep.mubr.f32.mxu0 0.0
    %227 = vmatmul.mubr.f32.gmra.mxu0 %v115
    %v228 = vpop.f32.mrf.mxu0
    %v229 = vadd.f32 0.0, %v228
    %v230 = vpop.f32.mrf.mxu0
    %231 = vmatprep.mubr.f32.mxu0 0.0
    %232 = vmatmul.mubr.f32.gmra.mxu0 %v118
    %v233 = vpop.f32.mrf.mxu0
    %v234 = vadd.f32 0.0, %v233
    %v235 = vpop.f32.mrf.mxu0
    %236 = vmatprep.mubr.f32.mxu0 0.0
    %237 = vmatmul.mubr.f32.gmra.mxu0 %v121
    %v238 = vpop.f32.mrf.mxu0
    %v239 = vadd.f32 0.0, %v238
    %v240 = vpop.f32.mrf.mxu0
    %241 = vmatprep.mubr.f32.mxu0 0.0
    %242 = vmatmul.mubr.f32.gmra.mxu0 %v124
    %v243 = vpop.f32.mrf.mxu0
    %v244 = vadd.f32 0.0, %v243
    %v245 = vpop.f32.mrf.mxu0
    %246 = vmatprep.mubr.f32.mxu0 0.0
    %247 = vmatmul.mubr.f32.gmra.mxu0 %v127
    %v248 = vpop.f32.mrf.mxu0
    %v249 = vadd.f32 0.0, %v248
    %v250 = vpop.f32.mrf.mxu0
    %251 = vmatprep.mubr.f32.mxu0 0.0
    %252 = vmatmul.mubr.f32.gmra.mxu0 %v130
    %v253 = vpop.f32.mrf.mxu0
    %v254 = vadd.f32 0.0, %v253
    %v255 = vpop.f32.mrf.mxu0
    %256 = vmatprep.mubr.f32.mxu0 0.0
    %257 = vmatmul.mubr.f32.gmra.mxu0 %v133
    %v258 = vpop.f32.mrf.mxu0
    %v259 = vadd.f32 0.0, %v258
    %v260 = vpop.f32.mrf.mxu0
    %261 = vmatprep.mubr.f32.mxu0 0.0
    %262 = vmatmul.mubr.f32.gmra.mxu0 %v136
    %v263 = vpop.f32.mrf.mxu0
    %v264 = vadd.f32 0.0, %v263
    %v265 = vpop.f32.mrf.mxu0
    %266 = vmatprep.mubr.f32.mxu0 0.0
    %267 = vmatmul.mubr.f32.gmra.mxu0 %v139
    %v268 = vpop.f32.mrf.mxu0
    %v269 = vadd.f32 0.0, %v268
    %v270 = vpop.f32.mrf.mxu0
    %271 = vmatprep.mubr.f32.mxu0 0.0
    %272 = vmatmul.mubr.f32.gmra.mxu0 %v142
    %v273 = vpop.f32.mrf.mxu0
    %v274 = vadd.f32 0.0, %v273
    %v275 = vpop.f32.mrf.mxu0
    %276 = vmatprep.mubr.f32.mxu0 0.0
    %277 = vmatmul.mubr.f32.gmra.mxu0 %v145
    %v278 = vpop.f32.mrf.mxu0
    %v279 = vadd.f32 0.0, %v278
    %v280 = vpop.f32.mrf.mxu0
    %281 = vmatprep.mubr.f32.mxu0 0.0
    %282 = vmatmul.mubr.f32.gmra.mxu0 %v148
    %v283 = vpop.f32.mrf.mxu0
    %v284 = vadd.f32 0.0, %v283
    %v285 = vpop.f32.mrf.mxu0
    %286 = vmatprep.mubr.f32.mxu0 0.0
    %287 = vmatmul.mubr.f32.gmra.mxu0 %v151
    %v288 = vpop.f32.mrf.mxu0
    %v289 = vadd.f32 0.0, %v288
    %v290 = vpop.f32.mrf.mxu0
    %291 = vmatprep.mubr.f32.mxu0 0.0
    %292 = vmatmul.mubr.f32.gmra.mxu0 %v154
    %v293 = vpop.f32.mrf.mxu0
    %v294 = vadd.f32 0.0, %v293
    %v295 = vpop.f32.mrf.mxu0
    %296 = vmatprep.mubr.f32.mxu0 0.0
    %297 = vmatmul.mubr.f32.gmra.mxu0 %v157
    %v298 = vpop.f32.mrf.mxu0
    %v299 = vadd.f32 0.0, %v298
    %v300 = vpop.f32.mrf.mxu0
    %301 = vmatprep.mubr.f32.mxu0 0.0
    %302 = vmatmul.mubr.f32.gmra.mxu0 %v160
    %v303 = vpop.f32.mrf.mxu0
    %v304 = vadd.f32 0.0, %v303
    %v305 = vpop.f32.mrf.mxu0
    %306 = vdwg.mxu0
    %v307 = vadd.f32 %v65, %v229
    %v308 = vadd.f32 %v66, %v234
    %v309 = vadd.f32 %v67, %v239
    %v310 = vadd.f32 %v68, %v244
    %v311 = vadd.f32 %v69, %v249
    %v312 = vadd.f32 %v70, %v254
    %v313 = vadd.f32 %v71, %v259
    %v314 = vadd.f32 %v72, %v264
    %v315 = vadd.f32 %v73, %v269
    %v316 = vadd.f32 %v74, %v274
    %v317 = vadd.f32 %v75, %v279
    %v318 = vadd.f32 %v76, %v284
    %v319 = vadd.f32 %v77, %v289
    %v320 = vadd.f32 %v78, %v294
    %v321 = vadd.f32 %v79, %v299
    %v322 = vadd.f32 %v80, %v304
    %323 = vst [vmem:[#allocation2] sm:$0xff] %v307
    %324 = vst [vmem:[#allocation2 + $0x8] sm:$0xff] %v308
    %325 = vst [vmem:[#allocation2 + $0x10] sm:$0xff] %v309
    %326 = vst [vmem:[#allocation2 + $0x18] sm:$0xff] %v310
    %327 = vst [vmem:[#allocation2 + $0x20] sm:$0xff] %v311
    %328 = vst [vmem:[#allocation2 + $0x28] sm:$0xff] %v312
    %329 = vst [vmem:[#allocation2 + $0x30] sm:$0xff] %v313
    %330 = vst [vmem:[#allocation2 + $0x38] sm:$0xff] %v314
    %331 = vst [vmem:[#allocation2 + $0x40] sm:$0xff] %v315
    %332 = vst [vmem:[#allocation2 + $0x48] sm:$0xff] %v316
    %333 = vst [vmem:[#allocation2 + $0x50] sm:$0xff] %v317
    %334 = vst [vmem:[#allocation2 + $0x58] sm:$0xff] %v318
    %335 = vst [vmem:[#allocation2 + $0x60] sm:$0xff] %v319
    %336 = vst [vmem:[#allocation2 + $0x68] sm:$0xff] %v320
    %337 = vst [vmem:[#allocation2 + $0x70] sm:$0xff] %v321
    %338 = vst [vmem:[#allocation2 + $0x78] sm:$0xff] %v322
    // Predicated region
    $region14: #{tpu_custom_call.1} parent=1 // pred_check
      %p339 = pneg %p12
    $region15: #{tpu_custom_call.1} parent=1 // pred_check_branch
      %341 = sbr.rel (%p339) target = $region17
    $region16: #{tpu_custom_call.1} parent=1 // pred_region
      %v342 = vld [vmem:[#allocation2] sm:$0xff]
      %v343 = vld [vmem:[#allocation2 + $0x8] sm:$0xff]
      %v344 = vld [vmem:[#allocation2 + $0x10] sm:$0xff]
      %v345 = vld [vmem:[#allocation2 + $0x18] sm:$0xff]
      %v346 = vld [vmem:[#allocation2 + $0x20] sm:$0xff]
      %v347 = vld [vmem:[#allocation2 + $0x28] sm:$0xff]
      %v348 = vld [vmem:[#allocation2 + $0x30] sm:$0xff]
      %v349 = vld [vmem:[#allocation2 + $0x38] sm:$0xff]
      %v350 = vld [vmem:[#allocation2 + $0x40] sm:$0xff]
      %v351 = vmul.f32 %v342, 0.0625
      %v352 = vmul.f32 %v343, 0.0625
      %v353 = vmul.f32 %v344, 0.0625
      %v354 = vmul.f32 %v345, 0.0625
      %v355 = vmul.f32 %v346, 0.0625
      %v356 = vmul.f32 %v347, 0.0625
      %v357 = vmul.f32 %v348, 0.0625
      %v358 = vmul.f32 %v349, 0.0625
      %360 = vset.pattern.permute.xlu0 65
      %361 = vperm.xlu0 %360, %v351
      %v362 = vpop.permute.xlu0 %361
      %365 = vset.pattern.permute.xlu0 65
      %366 = vperm.xlu0 %365, %v352
      %v367 = vpop.permute.xlu0 %366
      %370 = vset.pattern.permute.xlu0 65
      %371 = vperm.xlu0 %370, %v353
      %v372 = vpop.permute.xlu0 %371
      %375 = vset.pattern.permute.xlu0 65
      %376 = vperm.xlu0 %375, %v354
      %v377 = vpop.permute.xlu0 %376
      %380 = vset.pattern.permute.xlu0 65
      %381 = vperm.xlu0 %380, %v355
      %v382 = vpop.permute.xlu0 %381
      %385 = vset.pattern.permute.xlu0 65
      %386 = vperm.xlu0 %385, %v356
      %v387 = vpop.permute.xlu0 %386
      %390 = vset.pattern.permute.xlu0 65
      %391 = vperm.xlu0 %390, %v357
      %v392 = vpop.permute.xlu0 %391
      %395 = vset.pattern.permute.xlu0 65
      %396 = vperm.xlu0 %395, %v358
      %v397 = vpop.permute.xlu0 %396
      %v399 = vlaneseq
      %v400 = vshrl.u32 %v399, 7
      %v401 = vsub.s32 1, %v400
      %v402 = vrot.slane %v350, %v401
      %v403 = vmul.f32 %v362, %v402
      %v404 = vmul.f32 %v367, %v402
      %v405 = vmul.f32 %v372, %v402
      %v406 = vmul.f32 %v377, %v402
      %v407 = vmul.f32 %v382, %v402
      %v408 = vmul.f32 %v387, %v402
      %v409 = vmul.f32 %v392, %v402
      %v410 = vmul.f32 %v397, %v402
      %v411 = vsub.f32 %v342, %v403
      %v412 = vsub.f32 %v343, %v404
      %v413 = vsub.f32 %v344, %v405
      %v414 = vsub.f32 %v345, %v406
      %v415 = vsub.f32 %v346, %v407
      %v416 = vsub.f32 %v347, %v408
      %v417 = vsub.f32 %v348, %v409
      %v418 = vsub.f32 %v349, %v410
      %v419 = vmul.f32 %v350, 0.0625
      %v420 = vlaneseq
      %v421 = vshrl.u32 %v420, 7
      %v422 = vsub.s32 0, %v421
      %v423 = vrot.slane %v419, %v422
      %v424 = vmul.f32 %v342, %v423
      %v425 = vmul.f32 %v343, %v423
      %v426 = vmul.f32 %v344, %v423
      %v427 = vmul.f32 %v345, %v423
      %v428 = vmul.f32 %v346, %v423
      %v429 = vmul.f32 %v347, %v423
      %v430 = vmul.f32 %v348, %v423
      %v431 = vmul.f32 %v349, %v423
      %440 = vrot.lane.b32.xlu0 %v424, 127
      %v441 = vpop.permute.xlu0 %440
      %442 = vrot.lane.b32.xlu0 %v425, 127
      %v443 = vpop.permute.xlu0 %442
      %444 = vrot.lane.b32.xlu0 %v426, 127
      %v445 = vpop.permute.xlu0 %444
      %446 = vrot.lane.b32.xlu0 %v427, 127
      %v447 = vpop.permute.xlu0 %446
      %448 = vrot.lane.b32.xlu0 %v428, 127
      %v449 = vpop.permute.xlu0 %448
      %450 = vrot.lane.b32.xlu0 %v429, 127
      %v451 = vpop.permute.xlu0 %450
      %452 = vrot.lane.b32.xlu0 %v430, 127
      %v453 = vpop.permute.xlu0 %452
      %454 = vrot.lane.b32.xlu0 %v431, 127
      %v455 = vpop.permute.xlu0 %454
      %v464 = vsub.f32 %v342, %v441
      %v465 = vsub.f32 %v343, %v443
      %v466 = vsub.f32 %v344, %v445
      %v467 = vsub.f32 %v345, %v447
      %v468 = vsub.f32 %v346, %v449
      %v469 = vsub.f32 %v347, %v451
      %v470 = vsub.f32 %v348, %v453
      %v471 = vsub.f32 %v349, %v455
      %v472 = vmul.f32 %v350, %v350
      %v473 = vmul.f32 %v472, 0.0625
      %475 = vrot.lane.b32.xlu0 %v473, 127
      %v476 = vpop.permute.xlu0 %475
      %v478 = vsub.f32 %v350, %v476
      %v479 = vlaneseq
      %v480 = vshrl.u32 %v479, 7
      %v481 = vadd.s32 %v480, 8
      %v482 = vadd.s32 %v480, 16
      %v483 = vadd.s32 %v480, 24
      %v484 = vadd.s32 %v480, 32
      %v485 = vadd.s32 %v480, 40
      %v486 = vadd.s32 %v480, 48
      %v487 = vadd.s32 %v480, 56
      %vm488 = vcmp.eq.s32.totalorder %v480, %v37
      %vm489 = vcmp.eq.s32.totalorder %v481, %v37
      %vm490 = vcmp.eq.s32.totalorder %v482, %v37
      %vm491 = vcmp.eq.s32.totalorder %v483, %v37
      %vm492 = vcmp.eq.s32.totalorder %v484, %v37
      %vm493 = vcmp.eq.s32.totalorder %v485, %v37
      %vm494 = vcmp.eq.s32.totalorder %v486, %v37
      %vm495 = vcmp.eq.s32.totalorder %v487, %v37
      %v496 = vsel %vm488, %v411, 0.0
      %v497 = vsel %vm489, %v412, 0.0
      %v498 = vsel %vm490, %v413, 0.0
      %v499 = vsel %vm491, %v414, 0.0
      %v500 = vsel %vm492, %v415, 0.0
      %v501 = vsel %vm493, %v416, 0.0
      %v502 = vsel %vm494, %v417, 0.0
      %v503 = vsel %vm495, %v418, 0.0
      %v504 = vsel %vm62, %v496, 0.0
      %v505 = vsel %vm62, %v497, 0.0
      %v506 = vadd.f32 %v504, %v505
      %v507 = vsel %vm62, %v498, 0.0
      %v508 = vadd.f32 %v506, %v507
      %v509 = vsel %vm62, %v499, 0.0
      %v510 = vadd.f32 %v508, %v509
      %v511 = vsel %vm62, %v500, 0.0
      %v512 = vadd.f32 %v510, %v511
      %v513 = vsel %vm62, %v501, 0.0
      %v514 = vadd.f32 %v512, %v513
      %v515 = vsel %vm62, %v502, 0.0
      %v516 = vadd.f32 %v514, %v515
      %v517 = vsel %vm62, %v503, 0.0
      %v518 = vadd.f32 %v516, %v517
      %v519 = vrot.slane %v518, 4
      %v520 = vadd.f32 %v518, %v519
      %v521 = vrot.slane %v520, 2
      %v522 = vadd.f32 %v520, %v521
      %v523 = vrot.slane %v522, 1
      %v524 = vadd.f32 %v522, %v523
      %525 = vadd.xlane.f32.xlu0 %v504
      %v526 = vpop.xlane.xlu0 %525
      %527 = vadd.xlane.f32.xlu0 %v505
      %v528 = vpop.xlane.xlu0 %527
      %529 = vadd.xlane.f32.xlu0 %v507
      %v530 = vpop.xlane.xlu0 %529
      %531 = vadd.xlane.f32.xlu0 %v509
      %v532 = vpop.xlane.xlu0 %531
      %533 = vadd.xlane.f32.xlu0 %v511
      %v534 = vpop.xlane.xlu0 %533
      %535 = vadd.xlane.f32.xlu0 %v513
      %v536 = vpop.xlane.xlu0 %535
      %537 = vadd.xlane.f32.xlu0 %v515
      %v538 = vpop.xlane.xlu0 %537
      %539 = vadd.xlane.f32.xlu0 %v517
      %v540 = vpop.xlane.xlu0 %539
      %v541 = vrsqrt.pop %v524
      %v542 = vmul.f32 %v411, %v541
      %v543 = vmul.f32 %v412, %v541
      %v544 = vmul.f32 %v413, %v541
      %v545 = vmul.f32 %v414, %v541
      %v546 = vmul.f32 %v415, %v541
      %v547 = vmul.f32 %v416, %v541
      %v548 = vmul.f32 %v417, %v541
      %v549 = vmul.f32 %v418, %v541
      %v550 = vrsqrt.pop %v526
      %v551 = vrsqrt.pop %v528
      %v552 = vrsqrt.pop %v530
      %v553 = vrsqrt.pop %v532
      %v554 = vrsqrt.pop %v534
      %v555 = vrsqrt.pop %v536
      %v556 = vrsqrt.pop %v538
      %v557 = vrsqrt.pop %v540
      %v558 = vmul.f32 %v542, %v550
      %v559 = vmul.f32 %v543, %v551
      %v560 = vmul.f32 %v544, %v552
      %v561 = vmul.f32 %v545, %v553
      %v562 = vmul.f32 %v546, %v554
      %v563 = vmul.f32 %v547, %v555
      %v564 = vmul.f32 %v548, %v556
      %v565 = vmul.f32 %v549, %v557
      %v566 = vmul.f32 %v558, %v558
      %v567 = vmul.f32 %v559, %v559
      %v568 = vmul.f32 %v560, %v560
      %v569 = vmul.f32 %v561, %v561
      %v570 = vmul.f32 %v562, %v562
      %v571 = vmul.f32 %v563, %v563
      %v572 = vmul.f32 %v564, %v564
      %v573 = vmul.f32 %v565, %v565
      %v574 = vsel %vm62, %v566, 0.0
      %v575 = vsel %vm62, %v567, 0.0
      %v576 = vadd.f32 %v574, %v575
      %v577 = vsel %vm62, %v568, 0.0
      %v578 = vadd.f32 %v576, %v577
      %v579 = vsel %vm62, %v569, 0.0
      %v580 = vadd.f32 %v578, %v579
      %v581 = vsel %vm62, %v570, 0.0
      %v582 = vadd.f32 %v580, %v581
      %v583 = vsel %vm62, %v571, 0.0
      %v584 = vadd.f32 %v582, %v583
      %v585 = vsel %vm62, %v572, 0.0
      %v586 = vadd.f32 %v584, %v585
      %v587 = vsel %vm62, %v573, 0.0
      %v588 = vadd.f32 %v586, %v587
      %589 = vadd.xlane.f32.xlu0 %v588
      %v590 = vpop.xlane.xlu0 %589
      %v591 = vrot.slane %v590, 4
      %v592 = vadd.f32 %v590, %v591
      %v593 = vrot.slane %v592, 2
      %v594 = vadd.f32 %v592, %v593
      %v595 = vrot.slane %v594, 1
      %v596 = vadd.f32 %v594, %v595
      %s597 = vtos %v596
      %v598 = vstv %s597
      %v599 = vlaneseq
      %v600 = vshrl.u32 %v599, 7
      %v601 = vsub.s32 0, %v600
      %v602 = vrot.slane %v478, %v601
      %v603 = vmul.f32 %v526, %v602
      %v604 = vmul.f32 %v528, %v602
      %v605 = vmul.f32 %v530, %v602
      %v606 = vmul.f32 %v532, %v602
      %v607 = vmul.f32 %v534, %v602
      %v608 = vmul.f32 %v536, %v602
      %v609 = vmul.f32 %v538, %v602
      %v610 = vmul.f32 %v540, %v602
      %v611 = vrsqrt.pop %v603
      %v612 = vrsqrt.pop %v604
      %v613 = vrsqrt.pop %v605
      %v614 = vrsqrt.pop %v606
      %v615 = vrsqrt.pop %v607
      %v616 = vrsqrt.pop %v608
      %v617 = vrsqrt.pop %v609
      %v618 = vrsqrt.pop %v610
      %v619 = vmul.f32 %v464, %v611
      %v620 = vmul.f32 %v465, %v612
      %v621 = vmul.f32 %v466, %v613
      %v622 = vmul.f32 %v467, %v614
      %v623 = vmul.f32 %v468, %v615
      %v624 = vmul.f32 %v469, %v616
      %v625 = vmul.f32 %v470, %v617
      %v626 = vmul.f32 %v471, %v618
      %635 = vrot.lane.b32.xlu0 %v619, 64
      %v636 = vpop.permute.xlu0 %635
      %637 = vrot.lane.b32.xlu0 %v620, 64
      %v638 = vpop.permute.xlu0 %637
      %639 = vrot.lane.b32.xlu0 %v621, 64
      %v640 = vpop.permute.xlu0 %639
      %641 = vrot.lane.b32.xlu0 %v622, 64
      %v642 = vpop.permute.xlu0 %641
      %643 = vrot.lane.b32.xlu0 %v623, 64
      %v644 = vpop.permute.xlu0 %643
      %645 = vrot.lane.b32.xlu0 %v624, 64
      %v646 = vpop.permute.xlu0 %645
      %647 = vrot.lane.b32.xlu0 %v625, 64
      %v648 = vpop.permute.xlu0 %647
      %649 = vrot.lane.b32.xlu0 %v626, 64
      %v650 = vpop.permute.xlu0 %649
      %vm659 = vcmask 7168
      %v660 = vsel %vm659, %v636, 0.0
      %v661 = vsel %vm659, %v638, 0.0
      %v662 = vadd.f32 %v660, %v661
      %v663 = vsel %vm659, %v640, 0.0
      %v664 = vadd.f32 %v662, %v663
      %v665 = vsel %vm659, %v642, 0.0
      %v666 = vadd.f32 %v664, %v665
      %v667 = vsel %vm659, %v644, 0.0
      %v668 = vadd.f32 %v666, %v667
      %v669 = vsel %vm659, %v646, 0.0
      %v670 = vadd.f32 %v668, %v669
      %v671 = vsel %vm659, %v648, 0.0
      %v672 = vadd.f32 %v670, %v671
      %v673 = vsel %vm659, %v650, 0.0
      %v674 = vadd.f32 %v672, %v673
      %675 = vadd.xlane.f32.xlu0 %v674
      %v676 = vpop.xlane.xlu0 %675
      %v677 = vrot.slane %v676, 4
      %v678 = vadd.f32 %v676, %v677
      %v679 = vrot.slane %v678, 2
      %v680 = vadd.f32 %v678, %v679
      %v681 = vrot.slane %v680, 1
      %v682 = vadd.f32 %v680, %v681
      %s683 = vtos %v682
      %v684 = vstv %s683
      %693 = vrot.lane.b32.xlu0 %v464, 64
      %v694 = vpop.permute.xlu0 %693
      %695 = vrot.lane.b32.xlu0 %v465, 64
      %v696 = vpop.permute.xlu0 %695
      %697 = vrot.lane.b32.xlu0 %v466, 64
      %v698 = vpop.permute.xlu0 %697
      %699 = vrot.lane.b32.xlu0 %v467, 64
      %v700 = vpop.permute.xlu0 %699
      %701 = vrot.lane.b32.xlu0 %v468, 64
      %v702 = vpop.permute.xlu0 %701
      %703 = vrot.lane.b32.xlu0 %v469, 64
      %v704 = vpop.permute.xlu0 %703
      %705 = vrot.lane.b32.xlu0 %v470, 64
      %v706 = vpop.permute.xlu0 %705
      %707 = vrot.lane.b32.xlu0 %v471, 64
      %v708 = vpop.permute.xlu0 %707
      %v717 = vsel %vm659, %v694, 0.0
      %v718 = vsel %vm659, %v696, 0.0
      %v719 = vadd.f32 %v717, %v718
      %v720 = vsel %vm659, %v698, 0.0
      %v721 = vadd.f32 %v719, %v720
      %v722 = vsel %vm659, %v700, 0.0
      %v723 = vadd.f32 %v721, %v722
      %v724 = vsel %vm659, %v702, 0.0
      %v725 = vadd.f32 %v723, %v724
      %v726 = vsel %vm659, %v704, 0.0
      %v727 = vadd.f32 %v725, %v726
      %v728 = vsel %vm659, %v706, 0.0
      %v729 = vadd.f32 %v727, %v728
      %v730 = vsel %vm659, %v708, 0.0
      %v731 = vadd.f32 %v729, %v730
      %732 = vadd.xlane.f32.xlu0 %v731
      %v733 = vpop.xlane.xlu0 %732
      %v734 = vrot.slane %v733, 4
      %v735 = vadd.f32 %v733, %v734
      %v736 = vrot.slane %v735, 2
      %v737 = vadd.f32 %v735, %v736
      %v738 = vrot.slane %v737, 1
      %v739 = vadd.f32 %v737, %v738
      %s740 = vtos %v739
      %v741 = vstv %s740
      %v742 = vsel %vm62, %v411, 0.0
      %v743 = vsel %vm62, %v412, 0.0
      %v744 = vadd.f32 %v742, %v743
      %v745 = vsel %vm62, %v413, 0.0
      %v746 = vadd.f32 %v744, %v745
      %v747 = vsel %vm62, %v414, 0.0
      %v748 = vadd.f32 %v746, %v747
      %v749 = vsel %vm62, %v415, 0.0
      %v750 = vadd.f32 %v748, %v749
      %v751 = vsel %vm62, %v416, 0.0
      %v752 = vadd.f32 %v750, %v751
      %v753 = vsel %vm62, %v417, 0.0
      %v754 = vadd.f32 %v752, %v753
      %v755 = vsel %vm62, %v418, 0.0
      %v756 = vadd.f32 %v754, %v755
      %757 = vadd.xlane.f32.xlu0 %v756
      %v758 = vpop.xlane.xlu0 %757
      %v759 = vrot.slane %v758, 4
      %v760 = vadd.f32 %v758, %v759
      %v761 = vrot.slane %v760, 2
      %v762 = vadd.f32 %v760, %v761
      %v763 = vrot.slane %v762, 1
      %v764 = vadd.f32 %v762, %v763
      %s765 = vtos %v764
      %v766 = vstv %s765
      %v767 = vmul.f32 %v766, %v478
      %v768 = vrsqrt.pop %v767
      %v769 = vmul.f32 %v741, %v768
      %v770 = vmul.f32 %v598, 0.00024414063
      %v771 = vmul.f32 %v684, 0.015625
      %v772 = vsub.f32 %v770, %v771
      %v773 = vmul.f32 %v769, 0.5
      %v774 = vsub.f32 %v772, %v773
      %776 = vrot.lane.b32.xlu0 %v774, 64
      %v777 = vpop.permute.xlu0 %776
      %vm779 = vcmask 0
      %780 = vst.msk [vmem:[#allocation3] sm:$0x1] %vm779, %v777
    $region17: #{tpu_custom_call.1} parent=1 // pred_fallthru
      _
    // Predicated region
    $region18: #{tpu_custom_call.1} parent=1 // pred_check
      _
    $region19: #{tpu_custom_call.1} parent=1 // pred_check_branch
      %782 = sbr.rel (0) target = $region21
    $region20: #{tpu_custom_call.1} parent=1 // pred_region
      %s784 = ssub.s32 16, 16
      %785 = vsyncadd [#allocation4], %s784
      %s787 = sshll.u32 [#allocation3], 4
      %s788 = int_to_ptr.vmem [resolvable:$true] %s787
      %790 = dma.vmem_to_hbm [thread:$0]  %s788, 16, %s2, [#allocation4]
    $region21: #{tpu_custom_call.1} parent=1 // pred_fallthru
      _
    // Predicated region
    $region22: #{tpu_custom_call.1} parent=1 // pred_check
      _
    $region23: #{tpu_custom_call.1} parent=1 // pred_check_branch
      %792 = sbr.rel (0) target = $region25
    $region24: #{tpu_custom_call.1} parent=1 // pred_region
      %793 = dma.done [#allocation4], 16
    $region25: #{tpu_custom_call.1} parent=1 // pred_fallthru
      _
    %794 = vsyncpa [#allocation4], 1

</llo_original>
